<compile_context>
chip_gen: v7x
topology: tpu7x:2x2x1
jax: 0.10.0
libtpu: 0.0.40
codegen_flags: <defaults>
</compile_context>

<pallas_src>
import jax
import jax.numpy as jnp
from jax.experimental import pallas as pl
from jax.experimental.pallas import tpu as pltpu


def _round_up(n: int, m: int) -> int:
    return ((n + m - 1) // m) * m


# --------------------------- shared epilogue math ----------------------------
def _bn_lrelu(h, gamma, beta):
    """Training-mode BatchNorm1d folded to scale/shift, then LeakyReLU(0.2).

    One pass of axis-0 reductions: var = E[h^2] - mean^2 (biased, as PyTorch
    uses for normalization).  Padded features have gamma == 0 so they stay 0.
    """
    eps = jnp.float32(1e-5)
    slope = jnp.float32(0.2)
    mean = jnp.mean(h, axis=0, keepdims=True)
    mean_sq = jnp.mean(h * h, axis=0, keepdims=True)
    var = mean_sq - mean * mean
    scale = gamma * jax.lax.rsqrt(var + eps)          # rsqrt -> EUP slot
    shift = beta - mean * scale
    h = h * scale + shift
    return jnp.where(h >= 0, h, slope * h)


# ------------------------- fused (single-step) kernel ------------------------
def disc_fused_kernel(x_ref, w1_ref, g1_ref, be1_ref,
                      w2_ref, g2_ref, be2_ref,
                      w3_ref, b3_ref, out_ref):
    # Layer 1 (bias omitted — cancelled by training-mode BN mean subtraction).
    h = jnp.dot(x_ref[...].astype(w1_ref.dtype), w1_ref[...],
                preferred_element_type=jnp.float32)
    h = _bn_lrelu(h, g1_ref[...], be1_ref[...])
    # Layer 2 (bias omitted — cancelled by BN).
    h = jnp.dot(h.astype(w2_ref.dtype), w2_ref[...],
                preferred_element_type=jnp.float32)
    h = _bn_lrelu(h, g2_ref[...], be2_ref[...])
    # Output layer (bias kept: no BN follows).
    y = jnp.dot(h.astype(w3_ref.dtype), w3_ref[...],
                preferred_element_type=jnp.float32)
    out_ref[...] = y + b3_ref[...]


# ----------------------- K-tiled kernel (production path) --------------------
def disc_tiled_kernel(x_ref, w1_ref, g1_ref, be1_ref,
                      w2_ref, g2_ref, be2_ref,
                      w3_ref, b3_ref, out_ref,
                      acc_ref):
    k = pl.program_id(0)

    @pl.when(k == 0)
    def _():
        acc_ref[...] = jnp.zeros_like(acc_ref)

    # Layer-1 partial matmul over this K tile (bf16 MXU, f32 accumulation).
    acc_ref[...] += jnp.dot(x_ref[...].astype(w1_ref.dtype), w1_ref[...],
                            preferred_element_type=jnp.float32)

    @pl.when(k == pl.num_programs(0) - 1)
    def _():
        h = _bn_lrelu(acc_ref[...], g1_ref[...], be1_ref[...])
        h = jnp.dot(h.astype(w2_ref.dtype), w2_ref[...],
                    preferred_element_type=jnp.float32)
        h = _bn_lrelu(h, g2_ref[...], be2_ref[...])
        y = jnp.dot(h.astype(w3_ref.dtype), w3_ref[...],
                    preferred_element_type=jnp.float32)
        out_ref[...] = y + b3_ref[...]


# ------------------------------ VMEM budgeting --------------------------------
_F32, _BF16 = 4, 2
_FUSE_THRESHOLD_BYTES = 4 * 1024 * 1024     # fuse when w1 (bf16) fits in a few MiB
_VMEM_CAP_BYTES = 48 * 1024 * 1024          # safe on v7x (64 MiB/TC); v5e/v6e have 128 MiB
_TK_BUDGET_BYTES = 40 * 1024 * 1024


def _resident_bytes(B, hid_p, out_p):
    # Resident (constant index_map) operands; assume default double buffering.
    w_res = (hid_p * hid_p + hid_p * out_p) * _BF16
    small = (4 * hid_p + out_p) * _F32
    acc = B * hid_p * _F32
    out = B * out_p * _F32
    return 2 * (w_res + small + out) + acc


def _pick_tk(B, in_p, hid_p, out_p):
    """Largest 128-multiple dividing in_p whose double-buffered stream fits."""
    resident = _resident_bytes(B, hid_p, out_p)
    for cand in range(min(in_p, 2048), 127, -128):
        if in_p % cand:
            continue
        stream = 2 * (B * cand * _F32 + cand * hid_p * _BF16)
        if stream + resident <= _TK_BUDGET_BYTES:
            return cand
    return 128


def _vmem_limit(need_bytes):
    return int(min(max(2 * need_bytes + (2 << 20), 16 << 20), _VMEM_CAP_BYTES))


# --------------------------------- wrapper ------------------------------------
def discriminator_forward(x, params, noise_key=None, training=True,
                          force_tiled_tk=None):
    """Training-mode Discriminator forward.  x: (B, in_dim) f32 -> (B, out_dim) f32."""
    B, in_dim = x.shape
    hid_dim = params["g1"].shape[1]
    out_dim = params["w3"].shape[1]

    # GaussianNoiseLayer(mean=0, std=0.3): fresh noise per call, training only.
    if training and noise_key is not None:
        x = x + jnp.float32(0.3) * jax.random.normal(noise_key, x.shape, jnp.float32)

    # Lane-/MXU-friendly padded feature sizes (batch is NOT padded: padded rows
    # would corrupt BN batch statistics).
    in_p = _round_up(in_dim, 128)
    hid_p = _round_up(hid_dim, 128)
    out_p = _round_up(out_dim, 128)

    def pad2(a, rows, cols):
        return jnp.pad(a, ((0, rows - a.shape[0]), (0, cols - a.shape[1])))

    # Zero padding keeps padded lanes exactly zero through every layer; BN eps
    # guards the zero-variance padded features.  Weights pre-transposed to
    # (in_features, out_features) and cast to bf16; BN affine & b3 stay f32.
    x_p = pad2(x.astype(jnp.float32), B, in_p)
    w1 = pad2(params["w1"], in_p, hid_p).astype(jnp.bfloat16)
    w2 = pad2(params["w2"], hid_p, hid_p).astype(jnp.bfloat16)
    w3 = pad2(params["w3"], hid_p, out_p).astype(jnp.bfloat16)
    b3 = pad2(params["b3"], 1, out_p)
    g1 = pad2(params["g1"], 1, hid_p)
    be1 = pad2(params["be1"], 1, hid_p)
    g2 = pad2(params["g2"], 1, hid_p)
    be2 = pad2(params["be2"], 1, hid_p)

    operands = (x_p, w1, g1, be1, w2, g2, be2, w3, b3)
    w1_bytes = in_p * hid_p * _BF16
    use_fused = (force_tiled_tk is None) and (w1_bytes <= _FUSE_THRESHOLD_BYTES)

    if use_fused:
        # Single un-gridded call: whole forward in one kernel invocation, no
        # accumulator scratch, one layer-1 matmul.
        need = (B * in_p * _F32 + w1_bytes + _resident_bytes(B, hid_p, out_p))
        out_padded = pl.pallas_call(
            disc_fused_kernel,
            out_shape=jax.ShapeDtypeStruct((B, out_p), jnp.float32),
            compiler_params=pltpu.CompilerParams(
                vmem_limit_bytes=_vmem_limit(need)),
        )(*operands)
    else:
        tk = force_tiled_tk if force_tiled_tk is not None else _pick_tk(B, in_p, hid_p, out_p)
        assert in_p % tk == 0 and tk % 128 == 0
        need = 2 * (B * tk * _F32 + tk * hid_p * _BF16) + _resident_bytes(B, hid_p, out_p)
        grid_spec = pltpu.PrefetchScalarGridSpec(
            num_scalar_prefetch=0,
            grid=(in_p // tk,),
            in_specs=[
                pl.BlockSpec((B, tk),        lambda k: (0, k)),   # x (K-tiled)
                pl.BlockSpec((tk, hid_p),    lambda k: (k, 0)),   # w1 (pipelined)
                pl.BlockSpec((1, hid_p),     lambda k: (0, 0)),   # gamma1
                pl.BlockSpec((1, hid_p),     lambda k: (0, 0)),   # beta1
                pl.BlockSpec((hid_p, hid_p), lambda k: (0, 0)),   # w2 (resident)
                pl.BlockSpec((1, hid_p),     lambda k: (0, 0)),   # gamma2
                pl.BlockSpec((1, hid_p),     lambda k: (0, 0)),   # beta2
                pl.BlockSpec((hid_p, out_p), lambda k: (0, 0)),   # w3 (resident)
                pl.BlockSpec((1, out_p),     lambda k: (0, 0)),   # b3
            ],
            out_specs=pl.BlockSpec((B, out_p), lambda k: (0, 0)),
            scratch_shapes=[pltpu.VMEM((B, hid_p), jnp.float32)],
        )
        out_padded = pl.pallas_call(
            disc_tiled_kernel,
            out_shape=jax.ShapeDtypeStruct((B, out_p), jnp.float32),
            grid_spec=grid_spec,
            compiler_params=pltpu.CompilerParams(
                dimension_semantics=("arbitrary",),      # K is a reduction axis
                vmem_limit_bytes=_vmem_limit(need)),
        )(*operands)

    return out_padded[:, :out_dim]


# ------------------------------ parameter init --------------------------------
def init_params(key, in_dim, out_dim=1):
    """PyTorch-style Linear init (U(+/- 1/sqrt(fan_in))); BN gamma=1, beta=0.
    Weights stored as (in_features, out_features).  b1/b2 are intentionally
    omitted: a bias feeding a training-mode BatchNorm is cancelled by mean-sub."""
    hid_dim = in_dim // 2
    ks = jax.random.split(key, 6)

    def linear(kw, kb, fan_in, fan_out):
        bound = 1.0 / (float(fan_in) ** 0.5)
        w = jax.random.uniform(kw, (fan_in, fan_out), jnp.float32, -bound, bound)
        b = jax.random.uniform(kb, (1, fan_out), jnp.float32, -bound, bound)
        return w, b

    w1, _ = linear(ks[0], ks[1], in_dim, hid_dim)
    w2, _ = linear(ks[2], ks[3], hid_dim, hid_dim)
    w3, b3 = linear(ks[4], ks[5], hid_dim, out_dim)

    return dict(
        w1=w1, g1=jnp.ones((1, hid_dim), jnp.float32), be1=jnp.zeros((1, hid_dim), jnp.float32),
        w2=w2, g2=jnp.ones((1, hid_dim), jnp.float32), be2=jnp.zeros((1, hid_dim), jnp.float32),
        w3=w3, b3=b3,
    )


if __name__ == "__main__":
    # Module defaults: in_dim=300 -> hid_dim=150, out_dim=1.
    B, IN_DIM, OUT_DIM = 8, 300, 1

    key = jax.random.PRNGKey(0)
    k_x, k_p, k_n = jax.random.split(key, 3)
    x = jax.random.normal(k_x, (B, IN_DIM), jnp.float32)
    params = init_params(k_p, IN_DIM, OUT_DIM)

    # Default path: single fused (un-gridded) kernel.
    y = discriminator_forward(x, params, noise_key=k_n, training=True)
    jax.block_until_ready(y)
    assert y.shape == (B, OUT_DIM)
    assert bool(jnp.all(jnp.isfinite(y)))

    # Also exercise the K-tiled production path (same noise key -> same noise);
    # results must match the fused path up to f32 summation-order differences.
    y_tiled = discriminator_forward(x, params, noise_key=k_n, training=True,
                                    force_tiled_tk=128)
    jax.block_until_ready(y_tiled)
    assert y_tiled.shape == (B, OUT_DIM)
    assert bool(jnp.allclose(y, y_tiled, rtol=1e-2, atol=1e-2))

    print("KERNEL_OK")
</pallas_src>

<mosaic_0001>
module attributes {stable_mosaic.version = 11 : i64} {
  func.func @disc_fused_kernel(%arg0: memref<8x384xf32, #tpu.memory_space<vmem>>, %arg1: memref<384x256xbf16, #tpu.memory_space<vmem>>, %arg2: memref<1x256xf32, #tpu.memory_space<vmem>>, %arg3: memref<1x256xf32, #tpu.memory_space<vmem>>, %arg4: memref<256x256xbf16, #tpu.memory_space<vmem>>, %arg5: memref<1x256xf32, #tpu.memory_space<vmem>>, %arg6: memref<1x256xf32, #tpu.memory_space<vmem>>, %arg7: memref<256x128xbf16, #tpu.memory_space<vmem>>, %arg8: memref<1x128xf32, #tpu.memory_space<vmem>>, %arg9: memref<8x128xf32, #tpu.memory_space<vmem>>) attributes {dimension_semantics = [], scalar_prefetch = 0 : i64, scratch_operands = 0 : i64, tpu.core_type = #tpu.core_type<tc>} {
    %c0 = arith.constant 0 : index
    %c0_0 = arith.constant 0 : index
    %0 = vector.load %arg0[%c0, %c0_0] : memref<8x384xf32, #tpu.memory_space<vmem>>, vector<8x384xf32>
    %1 = arith.truncf %0 : vector<8x384xf32> to vector<8x384xbf16>
    %c0_1 = arith.constant 0 : index
    %c0_2 = arith.constant 0 : index
    %2 = vector.load %arg1[%c0_1, %c0_2] : memref<384x256xbf16, #tpu.memory_space<vmem>>, vector<384x256xbf16>
    %cst = arith.constant dense<0.000000e+00> : vector<8x256xf32>
    %3 = tpu.matmul %1, %2, %cst {dimension_numbers = #tpu.dot_dimension_numbers<[1], [0], [0], [1], [0, 0, 1, 1], [], []>} : vector<8x384xbf16>, vector<384x256xbf16>, vector<8x256xf32> -> vector<8x256xf32>
    %c0_3 = arith.constant 0 : index
    %c0_4 = arith.constant 0 : index
    %4 = vector.load %arg2[%c0_3, %c0_4] : memref<1x256xf32, #tpu.memory_space<vmem>>, vector<1x256xf32>
    %c0_5 = arith.constant 0 : index
    %c0_6 = arith.constant 0 : index
    %5 = vector.load %arg3[%c0_5, %c0_6] : memref<1x256xf32, #tpu.memory_space<vmem>>, vector<1x256xf32>
    %cst_7 = arith.constant dense<0.000000e+00> : vector<256xf32>
    %6 = vector.multi_reduction <add>, %3, %cst_7 [0] : vector<8x256xf32> to vector<256xf32>
    %7 = vector.shape_cast %6 : vector<256xf32> to vector<1x256xf32>
    %cst_8 = arith.constant 8.000000e+00 : f32
    %8 = vector.broadcast %cst_8 : f32 to vector<1x256xf32>
    %9 = arith.divf %7, %8 : vector<1x256xf32>
    %10 = arith.mulf %3, %3 : vector<8x256xf32>
    %cst_9 = arith.constant dense<0.000000e+00> : vector<256xf32>
    %11 = vector.multi_reduction <add>, %10, %cst_9 [0] : vector<8x256xf32> to vector<256xf32>
    %12 = vector.shape_cast %11 : vector<256xf32> to vector<1x256xf32>
    %cst_10 = arith.constant 8.000000e+00 : f32
    %13 = vector.broadcast %cst_10 : f32 to vector<1x256xf32>
    %14 = arith.divf %12, %13 : vector<1x256xf32>
    %15 = arith.mulf %9, %9 : vector<1x256xf32>
    %16 = arith.subf %14, %15 : vector<1x256xf32>
    %cst_11 = arith.constant 9.99999974E-6 : f32
    %17 = vector.broadcast %cst_11 : f32 to vector<1x256xf32>
    %18 = arith.addf %16, %17 : vector<1x256xf32>
    %19 = math.rsqrt %18 : vector<1x256xf32>
    %20 = arith.mulf %4, %19 : vector<1x256xf32>
    %21 = arith.mulf %9, %20 : vector<1x256xf32>
    %22 = arith.subf %5, %21 : vector<1x256xf32>
    %23 = vector.broadcast %20 : vector<1x256xf32> to vector<8x256xf32>
    %24 = arith.mulf %3, %23 : vector<8x256xf32>
    %25 = vector.broadcast %22 : vector<1x256xf32> to vector<8x256xf32>
    %26 = arith.addf %24, %25 : vector<8x256xf32>
    %cst_12 = arith.constant 0.000000e+00 : f32
    %27 = vector.broadcast %cst_12 : f32 to vector<8x256xf32>
    %28 = arith.cmpf oge, %26, %27 : vector<8x256xf32>
    %cst_13 = arith.constant 2.000000e-01 : f32
    %29 = vector.broadcast %cst_13 : f32 to vector<8x256xf32>
    %30 = arith.mulf %29, %26 : vector<8x256xf32>
    %31 = arith.select %28, %26, %30 : vector<8x256xi1>, vector<8x256xf32>
    %32 = arith.truncf %31 : vector<8x256xf32> to vector<8x256xbf16>
    %c0_14 = arith.constant 0 : index
    %c0_15 = arith.constant 0 : index
    %33 = vector.load %arg4[%c0_14, %c0_15] : memref<256x256xbf16, #tpu.memory_space<vmem>>, vector<256x256xbf16>
    %cst_16 = arith.constant dense<0.000000e+00> : vector<8x256xf32>
    %34 = tpu.matmul %32, %33, %cst_16 {dimension_numbers = #tpu.dot_dimension_numbers<[1], [0], [0], [1], [0, 0, 1, 1], [], []>} : vector<8x256xbf16>, vector<256x256xbf16>, vector<8x256xf32> -> vector<8x256xf32>
    %c0_17 = arith.constant 0 : index
    %c0_18 = arith.constant 0 : index
    %35 = vector.load %arg5[%c0_17, %c0_18] : memref<1x256xf32, #tpu.memory_space<vmem>>, vector<1x256xf32>
    %c0_19 = arith.constant 0 : index
    %c0_20 = arith.constant 0 : index
    %36 = vector.load %arg6[%c0_19, %c0_20] : memref<1x256xf32, #tpu.memory_space<vmem>>, vector<1x256xf32>
    %cst_21 = arith.constant dense<0.000000e+00> : vector<256xf32>
    %37 = vector.multi_reduction <add>, %34, %cst_21 [0] : vector<8x256xf32> to vector<256xf32>
    %38 = vector.shape_cast %37 : vector<256xf32> to vector<1x256xf32>
    %cst_22 = arith.constant 8.000000e+00 : f32
    %39 = vector.broadcast %cst_22 : f32 to vector<1x256xf32>
    %40 = arith.divf %38, %39 : vector<1x256xf32>
    %41 = arith.mulf %34, %34 : vector<8x256xf32>
    %cst_23 = arith.constant dense<0.000000e+00> : vector<256xf32>
    %42 = vector.multi_reduction <add>, %41, %cst_23 [0] : vector<8x256xf32> to vector<256xf32>
    %43 = vector.shape_cast %42 : vector<256xf32> to vector<1x256xf32>
    %cst_24 = arith.constant 8.000000e+00 : f32
    %44 = vector.broadcast %cst_24 : f32 to vector<1x256xf32>
    %45 = arith.divf %43, %44 : vector<1x256xf32>
    %46 = arith.mulf %40, %40 : vector<1x256xf32>
    %47 = arith.subf %45, %46 : vector<1x256xf32>
    %cst_25 = arith.constant 9.99999974E-6 : f32
    %48 = vector.broadcast %cst_25 : f32 to vector<1x256xf32>
    %49 = arith.addf %47, %48 : vector<1x256xf32>
    %50 = math.rsqrt %49 : vector<1x256xf32>
    %51 = arith.mulf %35, %50 : vector<1x256xf32>
    %52 = arith.mulf %40, %51 : vector<1x256xf32>
    %53 = arith.subf %36, %52 : vector<1x256xf32>
    %54 = vector.broadcast %51 : vector<1x256xf32> to vector<8x256xf32>
    %55 = arith.mulf %34, %54 : vector<8x256xf32>
    %56 = vector.broadcast %53 : vector<1x256xf32> to vector<8x256xf32>
    %57 = arith.addf %55, %56 : vector<8x256xf32>
    %cst_26 = arith.constant 0.000000e+00 : f32
    %58 = vector.broadcast %cst_26 : f32 to vector<8x256xf32>
    %59 = arith.cmpf oge, %57, %58 : vector<8x256xf32>
    %cst_27 = arith.constant 2.000000e-01 : f32
    %60 = vector.broadcast %cst_27 : f32 to vector<8x256xf32>
    %61 = arith.mulf %60, %57 : vector<8x256xf32>
    %62 = arith.select %59, %57, %61 : vector<8x256xi1>, vector<8x256xf32>
    %63 = arith.truncf %62 : vector<8x256xf32> to vector<8x256xbf16>
    %c0_28 = arith.constant 0 : index
    %c0_29 = arith.constant 0 : index
    %64 = vector.load %arg7[%c0_28, %c0_29] : memref<256x128xbf16, #tpu.memory_space<vmem>>, vector<256x128xbf16>
    %cst_30 = arith.constant dense<0.000000e+00> : vector<8x128xf32>
    %65 = tpu.matmul %63, %64, %cst_30 {dimension_numbers = #tpu.dot_dimension_numbers<[1], [0], [0], [1], [0, 0, 1, 1], [], []>} : vector<8x256xbf16>, vector<256x128xbf16>, vector<8x128xf32> -> vector<8x128xf32>
    %c0_31 = arith.constant 0 : index
    %c0_32 = arith.constant 0 : index
    %66 = vector.load %arg8[%c0_31, %c0_32] : memref<1x128xf32, #tpu.memory_space<vmem>>, vector<1x128xf32>
    %67 = vector.broadcast %66 : vector<1x128xf32> to vector<8x128xf32>
    %68 = arith.addf %65, %67 : vector<8x128xf32>
    %c0_33 = arith.constant 0 : index
    %c0_34 = arith.constant 0 : index
    %69 = vector.load %arg9[%c0_33, %c0_34] : memref<8x128xf32, #tpu.memory_space<vmem>>, vector<8x128xf32>
    tpu.vector_store %arg9[%c0_33, %c0_34], %68 {strides = array<i32>} : memref<8x128xf32, #tpu.memory_space<vmem>>, vector<8x128xf32>,
    return
  }
}

</mosaic_0001>

<llo_original>
// kernel: tpu_custom_call.1
$region0: #{tpu_custom_call.1}
  #allocation0 [shape = 'u32[]', space=smem, size = 0x4, offset = 0x4, fixed_abs, tag = 'smem constant byte address 0x4 - core index']
  #allocation1 [shape = 'u32[144,128]{1,0:T(1,128)}', space=vmem, size = 0x12000, scoped, tag = 'internal scratch']
  %s0 = inlined_call_operand.hbm [shape: f32[8,384], index: 0, kind: input, shape index: {}]
  %s1 = inlined_call_operand.hbm [shape: bf16[384,256], index: 1, kind: input, shape index: {}]
  %s2 = inlined_call_operand.vmem [shape: f32[1,256], index: 2, kind: input, shape index: {}]
  %s3 = inlined_call_operand.vmem [shape: f32[1,256], index: 3, kind: input, shape index: {}]
  %s4 = inlined_call_operand.hbm [shape: bf16[256,256], index: 4, kind: input, shape index: {}]
  %s5 = inlined_call_operand.vmem [shape: f32[1,256], index: 5, kind: input, shape index: {}]
  %s6 = inlined_call_operand.vmem [shape: f32[1,256], index: 6, kind: input, shape index: {}]
  %s7 = inlined_call_operand.hbm [shape: bf16[256,128], index: 7, kind: input, shape index: {}]
  %s8 = inlined_call_operand.vmem [shape: f32[1,128], index: 8, kind: input, shape index: {}]
  %s9 = inlined_call_operand.hbm [shape: f32[8,128], index: 9, kind: output, shape index: {}]
  %s10 = sld [smem:[#allocation0]]
  $region62: #{tpu_custom_call.1} parent=0
    _
  %s12 = ssub.s32 1, %s10
  %s13 = scalar_select 0, %s12, %s10
  $region1: #{tpu_custom_call.1} parent=0
    #allocation2 [shape = 'u8[12288]{0}', space=vmem, size = 0x3000, scoped, tag = 'input window, operand 0, single buffered']
    #allocation3 [shape = 's32[1]{0}', space=sflag, size = 0x4, scoped, tag = 'scoped memory for tpu_custom_call.1']
    #allocation4 [shape = 's32[1]{0}', space=sflag, size = 0x4, scoped, tag = 'scoped memory for tpu_custom_call.1']
    #allocation5 [shape = 'u8[196608]{0}', space=vmem, size = 0x30000, scoped, tag = 'input window, operand 1, single buffered']
    #allocation6 [shape = 's32[1]{0}', space=sflag, size = 0x4, scoped, tag = 'scoped memory for tpu_custom_call.1']
    #allocation7 [shape = 'u8[131072]{0}', space=vmem, size = 0x20000, scoped, tag = 'input window, operand 4, single buffered']
    #allocation8 [shape = 'u8[65536]{0}', space=vmem, size = 0x10000, scoped, tag = 'input window, operand 7, single buffered']
    #allocation9 [shape = 's32[1]{0}', space=sflag, size = 0x4, scoped, tag = 'scoped memory for tpu_custom_call.1']
    #allocation10 [shape = 'u8[4096]{0}', space=vmem, size = 0x1000, scoped, tag = 'output window, operand 0, single buffered']
    %14 = vsyncpa [#allocation3], 0
    %15 = vsyncpa [#allocation6], 0
    %16 = vsyncpa [#allocation9], 0
    %17 = vsyncpa [#allocation4], 0
    // Predicated region
    $region2: #{tpu_custom_call.1} parent=1 // pred_check
      _
    $region3: #{tpu_custom_call.1} parent=1 // pred_check_branch
      %19 = sbr.rel (0) target = $region5
    $region4: #{tpu_custom_call.1} parent=1 // pred_region
      %s21 = ssub.s32 384, 384
      %22 = vsyncadd [#allocation3], %s21
      %s24 = sshll.u32 [#allocation2], 4
      %s25 = int_to_ptr.vmem [resolvable:$true] %s24
      %27 = dma.hbm_to_vmem [thread:$0]  %s0, 384, %s25, [#allocation3]
    $region5: #{tpu_custom_call.1} parent=1 // pred_fallthru
      _
    // Predicated region
    $region6: #{tpu_custom_call.1} parent=1 // pred_check
      _
    $region7: #{tpu_custom_call.1} parent=1 // pred_check_branch
      %29 = sbr.rel (0) target = $region9
    $region8: #{tpu_custom_call.1} parent=1 // pred_region
      %s31 = ssub.s32 6144, 6144
      %32 = vsyncadd [#allocation6], %s31
      %s33 = sshll.u32 [#allocation5], 4
      %s34 = int_to_ptr.vmem [resolvable:$true] %s33
      %39 = dma.hbm_to_vmem [thread:$0]  %s1, 6144, %s34, [#allocation6], 128, 128, 8
    $region9: #{tpu_custom_call.1} parent=1 // pred_fallthru
      _
    // Predicated region
    $region10: #{tpu_custom_call.1} parent=1 // pred_check
      _
    $region11: #{tpu_custom_call.1} parent=1 // pred_check_branch
      %41 = sbr.rel (0) target = $region13
    $region12: #{tpu_custom_call.1} parent=1 // pred_region
      _
    $region13: #{tpu_custom_call.1} parent=1 // pred_fallthru
      _
    // Predicated region
    $region14: #{tpu_custom_call.1} parent=1 // pred_check
      _
    $region15: #{tpu_custom_call.1} parent=1 // pred_check_branch
      %43 = sbr.rel (0) target = $region17
    $region16: #{tpu_custom_call.1} parent=1 // pred_region
      _
    $region17: #{tpu_custom_call.1} parent=1 // pred_fallthru
      _
    // Predicated region
    $region18: #{tpu_custom_call.1} parent=1 // pred_check
      _
    $region19: #{tpu_custom_call.1} parent=1 // pred_check_branch
      %45 = sbr.rel (0) target = $region21
    $region20: #{tpu_custom_call.1} parent=1 // pred_region
      %s47 = ssub.s32 4096, 4096
      %48 = vsyncadd [#allocation6], %s47
      %s49 = sshll.u32 [#allocation7], 4
      %s50 = int_to_ptr.vmem [resolvable:$true] %s49
      %55 = dma.hbm_to_vmem [thread:$0]  %s4, 4096, %s50, [#allocation6], 128, 128, 8
    $region21: #{tpu_custom_call.1} parent=1 // pred_fallthru
      _
    // Predicated region
    $region22: #{tpu_custom_call.1} parent=1 // pred_check
      _
    $region23: #{tpu_custom_call.1} parent=1 // pred_check_branch
      %57 = sbr.rel (0) target = $region25
    $region24: #{tpu_custom_call.1} parent=1 // pred_region
      _
    $region25: #{tpu_custom_call.1} parent=1 // pred_fallthru
      _
    // Predicated region
    $region26: #{tpu_custom_call.1} parent=1 // pred_check
      _
    $region27: #{tpu_custom_call.1} parent=1 // pred_check_branch
      %59 = sbr.rel (0) target = $region29
    $region28: #{tpu_custom_call.1} parent=1 // pred_region
      _
    $region29: #{tpu_custom_call.1} parent=1 // pred_fallthru
      _
    // Predicated region
    $region30: #{tpu_custom_call.1} parent=1 // pred_check
      _
    $region31: #{tpu_custom_call.1} parent=1 // pred_check_branch
      %61 = sbr.rel (0) target = $region33
    $region32: #{tpu_custom_call.1} parent=1 // pred_region
      %s63 = ssub.s32 2048, 2048
      %64 = vsyncadd [#allocation9], %s63
      %s65 = sshll.u32 [#allocation8], 4
      %s66 = int_to_ptr.vmem [resolvable:$true] %s65
      %71 = dma.hbm_to_vmem [thread:$0]  %s7, 2048, %s66, [#allocation9], 64, 64, 4
    $region33: #{tpu_custom_call.1} parent=1 // pred_fallthru
      _
    // Predicated region
    $region34: #{tpu_custom_call.1} parent=1 // pred_check
      _
    $region35: #{tpu_custom_call.1} parent=1 // pred_check_branch
      %73 = sbr.rel (0) target = $region37
    $region36: #{tpu_custom_call.1} parent=1 // pred_region
      _
    $region37: #{tpu_custom_call.1} parent=1 // pred_fallthru
      _
    // Predicated region
    $region38: #{tpu_custom_call.1} parent=1 // pred_check
      _
    $region39: #{tpu_custom_call.1} parent=1 // pred_check_branch
      %75 = sbr.rel (0) target = $region41
    $region40: #{tpu_custom_call.1} parent=1 // pred_region
      %76 = dma.done [#allocation3], 384
    $region41: #{tpu_custom_call.1} parent=1 // pred_fallthru
      _
    // Predicated region
    $region42: #{tpu_custom_call.1} parent=1 // pred_check
      _
    $region43: #{tpu_custom_call.1} parent=1 // pred_check_branch
      %78 = sbr.rel (0) target = $region45
    $region44: #{tpu_custom_call.1} parent=1 // pred_region
      %79 = dma.done [#allocation6], 6144
    $region45: #{tpu_custom_call.1} parent=1 // pred_fallthru
      _
    // Predicated region
    $region46: #{tpu_custom_call.1} parent=1 // pred_check
      _
    $region47: #{tpu_custom_call.1} parent=1 // pred_check_branch
      %81 = sbr.rel (0) target = $region49
    $region48: #{tpu_custom_call.1} parent=1 // pred_region
      %82 = dma.done [#allocation6], 4096
    $region49: #{tpu_custom_call.1} parent=1 // pred_fallthru
      _
    // Predicated region
    $region50: #{tpu_custom_call.1} parent=1 // pred_check
      _
    $region51: #{tpu_custom_call.1} parent=1 // pred_check_branch
      %84 = sbr.rel (0) target = $region53
    $region52: #{tpu_custom_call.1} parent=1 // pred_region
      %85 = dma.done [#allocation9], 2048
    $region53: #{tpu_custom_call.1} parent=1 // pred_fallthru
      _
    %v87 = vld [vmem:[#allocation2] sm:$0xff]
    %v88 = vld [vmem:[#allocation2 + $0x8] sm:$0xff]
    %v89 = vld [vmem:[#allocation2 + $0x10] sm:$0xff]
    %v90 = vpack.c.bf16 %v87, %v87
    %v91 = vpack.c.bf16 %v88, %v88
    %v92 = vpack.c.bf16 %v89, %v89
    %v93 = vld [vmem:[#allocation5] sm:$0xff]
    %v94 = vld [vmem:[#allocation5 + $0x8] sm:$0xff]
    %v95 = vld [vmem:[#allocation5 + $0x10] sm:$0xff]
    %v96 = vld [vmem:[#allocation5 + $0x18] sm:$0xff]
    %v97 = vld [vmem:[#allocation5 + $0x20] sm:$0xff]
    %v98 = vld [vmem:[#allocation5 + $0x28] sm:$0xff]
    %v99 = vld [vmem:[#allocation5 + $0x30] sm:$0xff]
    %v100 = vld [vmem:[#allocation5 + $0x38] sm:$0xff]
    %v101 = vld [vmem:[#allocation5 + $0x40] sm:$0xff]
    %v102 = vld [vmem:[#allocation5 + $0x48] sm:$0xff]
    %v103 = vld [vmem:[#allocation5 + $0x50] sm:$0xff]
    %v104 = vld [vmem:[#allocation5 + $0x58] sm:$0xff]
    %v105 = vld [vmem:[#allocation5 + $0x60] sm:$0xff]
    %v106 = vld [vmem:[#allocation5 + $0x68] sm:$0xff]
    %v107 = vld [vmem:[#allocation5 + $0x70] sm:$0xff]
    %v108 = vld [vmem:[#allocation5 + $0x78] sm:$0xff]
    %v109 = vld [vmem:[#allocation5 + $0x80] sm:$0xff]
    %v110 = vld [vmem:[#allocation5 + $0x88] sm:$0xff]
    %v111 = vld [vmem:[#allocation5 + $0x90] sm:$0xff]
    %v112 = vld [vmem:[#allocation5 + $0x98] sm:$0xff]
    %v113 = vld [vmem:[#allocation5 + $0xa0] sm:$0xff]
    %v114 = vld [vmem:[#allocation5 + $0xa8] sm:$0xff]
    %v115 = vld [vmem:[#allocation5 + $0xb0] sm:$0xff]
    %v116 = vld [vmem:[#allocation5 + $0xb8] sm:$0xff]
    %v117 = vld [vmem:[#allocation5 + $0xc0] sm:$0xff]
    %v118 = vld [vmem:[#allocation5 + $0xc8] sm:$0xff]
    %v119 = vld [vmem:[#allocation5 + $0xd0] sm:$0xff]
    %v120 = vld [vmem:[#allocation5 + $0xd8] sm:$0xff]
    %v121 = vld [vmem:[#allocation5 + $0xe0] sm:$0xff]
    %v122 = vld [vmem:[#allocation5 + $0xe8] sm:$0xff]
    %v123 = vld [vmem:[#allocation5 + $0xf0] sm:$0xff]
    %v124 = vld [vmem:[#allocation5 + $0xf8] sm:$0xff]
    %v125 = vld [vmem:[#allocation5 + $0x100] sm:$0xff]
    %v126 = vld [vmem:[#allocation5 + $0x108] sm:$0xff]
    %v127 = vld [vmem:[#allocation5 + $0x110] sm:$0xff]
    %v128 = vld [vmem:[#allocation5 + $0x118] sm:$0xff]
    %v129 = vld [vmem:[#allocation5 + $0x120] sm:$0xff]
    %v130 = vld [vmem:[#allocation5 + $0x128] sm:$0xff]
    %v131 = vld [vmem:[#allocation5 + $0x130] sm:$0xff]
    %v132 = vld [vmem:[#allocation5 + $0x138] sm:$0xff]
    %v133 = vld [vmem:[#allocation5 + $0x140] sm:$0xff]
    %v134 = vld [vmem:[#allocation5 + $0x148] sm:$0xff]
    %v135 = vld [vmem:[#allocation5 + $0x150] sm:$0xff]
    %v136 = vld [vmem:[#allocation5 + $0x158] sm:$0xff]
    %v137 = vld [vmem:[#allocation5 + $0x160] sm:$0xff]
    %v138 = vld [vmem:[#allocation5 + $0x168] sm:$0xff]
    %v139 = vld [vmem:[#allocation5 + $0x170] sm:$0xff]
    %v140 = vld [vmem:[#allocation5 + $0x178] sm:$0xff]
    %v189 = vunpack.c.l.b16 %v93
    %v190 = vunpack.c.h.b16 %v93
    %v191 = vunpack.c.l.b16 %v94
    %v192 = vunpack.c.h.b16 %v94
    %v193 = vunpack.c.l.b16 %v95
    %v194 = vunpack.c.h.b16 %v95
    %v195 = vunpack.c.l.b16 %v96
    %v196 = vunpack.c.h.b16 %v96
    %v197 = vunpack.c.l.b16 %v97
    %v198 = vunpack.c.h.b16 %v97
    %v199 = vunpack.c.l.b16 %v98
    %v200 = vunpack.c.h.b16 %v98
    %v201 = vunpack.c.l.b16 %v99
    %v202 = vunpack.c.h.b16 %v99
    %v203 = vunpack.c.l.b16 %v100
    %v204 = vunpack.c.h.b16 %v100
    %v205 = vunpack.c.l.b16 %v101
    %v206 = vunpack.c.h.b16 %v101
    %v207 = vunpack.c.l.b16 %v102
    %v208 = vunpack.c.h.b16 %v102
    %v209 = vunpack.c.l.b16 %v103
    %v210 = vunpack.c.h.b16 %v103
    %v211 = vunpack.c.l.b16 %v104
    %v212 = vunpack.c.h.b16 %v104
    %v213 = vunpack.c.l.b16 %v105
    %v214 = vunpack.c.h.b16 %v105
    %v215 = vunpack.c.l.b16 %v106
    %v216 = vunpack.c.h.b16 %v106
    %v217 = vunpack.c.l.b16 %v107
    %v218 = vunpack.c.h.b16 %v107
    %v219 = vunpack.c.l.b16 %v108
    %v220 = vunpack.c.h.b16 %v108
    %v221 = vunpack.c.l.b16 %v109
    %v222 = vunpack.c.h.b16 %v109
    %v223 = vunpack.c.l.b16 %v110
    %v224 = vunpack.c.h.b16 %v110
    %v225 = vunpack.c.l.b16 %v111
    %v226 = vunpack.c.h.b16 %v111
    %v227 = vunpack.c.l.b16 %v112
    %v228 = vunpack.c.h.b16 %v112
    %v229 = vunpack.c.l.b16 %v113
    %v230 = vunpack.c.h.b16 %v113
    %v231 = vunpack.c.l.b16 %v114
    %v232 = vunpack.c.h.b16 %v114
    %v233 = vunpack.c.l.b16 %v115
    %v234 = vunpack.c.h.b16 %v115
    %v235 = vunpack.c.l.b16 %v116
    %v236 = vunpack.c.h.b16 %v116
    %v237 = vunpack.c.l.b16 %v117
    %v238 = vunpack.c.h.b16 %v117
    %v239 = vunpack.c.l.b16 %v118
    %v240 = vunpack.c.h.b16 %v118
    %v241 = vunpack.c.l.b16 %v119
    %v242 = vunpack.c.h.b16 %v119
    %v243 = vunpack.c.l.b16 %v120
    %v244 = vunpack.c.h.b16 %v120
    %v245 = vunpack.c.l.b16 %v121
    %v246 = vunpack.c.h.b16 %v121
    %v247 = vunpack.c.l.b16 %v122
    %v248 = vunpack.c.h.b16 %v122
    %v249 = vunpack.c.l.b16 %v123
    %v250 = vunpack.c.h.b16 %v123
    %v251 = vunpack.c.l.b16 %v124
    %v252 = vunpack.c.h.b16 %v124
    %v253 = vunpack.c.l.b16 %v125
    %v254 = vunpack.c.h.b16 %v125
    %v255 = vunpack.c.l.b16 %v126
    %v256 = vunpack.c.h.b16 %v126
    %v257 = vunpack.c.l.b16 %v127
    %v258 = vunpack.c.h.b16 %v127
    %v259 = vunpack.c.l.b16 %v128
    %v260 = vunpack.c.h.b16 %v128
    %v261 = vunpack.c.l.b16 %v129
    %v262 = vunpack.c.h.b16 %v129
    %v263 = vunpack.c.l.b16 %v130
    %v264 = vunpack.c.h.b16 %v130
    %v265 = vunpack.c.l.b16 %v131
    %v266 = vunpack.c.h.b16 %v131
    %v267 = vunpack.c.l.b16 %v132
    %v268 = vunpack.c.h.b16 %v132
    %v269 = vunpack.c.l.b16 %v133
    %v270 = vunpack.c.h.b16 %v133
    %v271 = vunpack.c.l.b16 %v134
    %v272 = vunpack.c.h.b16 %v134
    %v273 = vunpack.c.l.b16 %v135
    %v274 = vunpack.c.h.b16 %v135
    %v275 = vunpack.c.l.b16 %v136
    %v276 = vunpack.c.h.b16 %v136
    %v277 = vunpack.c.l.b16 %v137
    %v278 = vunpack.c.h.b16 %v137
    %v279 = vunpack.c.l.b16 %v138
    %v280 = vunpack.c.h.b16 %v138
    %v281 = vunpack.c.l.b16 %v139
    %v282 = vunpack.c.h.b16 %v139
    %v283 = vunpack.c.l.b16 %v140
    %v284 = vunpack.c.h.b16 %v140
    %v285 = vpack.c.b16 %v191, %v189
    %v286 = vpack.c.b16 %v192, %v190
    %v287 = vpack.c.b16 %v195, %v193
    %v288 = vpack.c.b16 %v196, %v194
    %v289 = vpack.c.b16 %v199, %v197
    %v290 = vpack.c.b16 %v200, %v198
    %v291 = vpack.c.b16 %v203, %v201
    %v292 = vpack.c.b16 %v204, %v202
    %v293 = vpack.c.b16 %v207, %v205
    %v294 = vpack.c.b16 %v208, %v206
    %v295 = vpack.c.b16 %v211, %v209
    %v296 = vpack.c.b16 %v212, %v210
    %v297 = vpack.c.b16 %v215, %v213
    %v298 = vpack.c.b16 %v216, %v214
    %v299 = vpack.c.b16 %v219, %v217
    %v300 = vpack.c.b16 %v220, %v218
    %v301 = vpack.c.b16 %v223, %v221
    %v302 = vpack.c.b16 %v224, %v222
    %v303 = vpack.c.b16 %v227, %v225
    %v304 = vpack.c.b16 %v228, %v226
    %v305 = vpack.c.b16 %v231, %v229
    %v306 = vpack.c.b16 %v232, %v230
    %v307 = vpack.c.b16 %v235, %v233
    %v308 = vpack.c.b16 %v236, %v234
    %v309 = vpack.c.b16 %v239, %v237
    %v310 = vpack.c.b16 %v240, %v238
    %v311 = vpack.c.b16 %v243, %v241
    %v312 = vpack.c.b16 %v244, %v242
    %v313 = vpack.c.b16 %v247, %v245
    %v314 = vpack.c.b16 %v248, %v246
    %v315 = vpack.c.b16 %v251, %v249
    %v316 = vpack.c.b16 %v252, %v250
    %v317 = vpack.c.b16 %v255, %v253
    %v318 = vpack.c.b16 %v256, %v254
    %v319 = vpack.c.b16 %v259, %v257
    %v320 = vpack.c.b16 %v260, %v258
    %v321 = vpack.c.b16 %v263, %v261
    %v322 = vpack.c.b16 %v264, %v262
    %v323 = vpack.c.b16 %v267, %v265
    %v324 = vpack.c.b16 %v268, %v266
    %v325 = vpack.c.b16 %v271, %v269
    %v326 = vpack.c.b16 %v272, %v270
    %v327 = vpack.c.b16 %v275, %v273
    %v328 = vpack.c.b16 %v276, %v274
    %v329 = vpack.c.b16 %v279, %v277
    %v330 = vpack.c.b16 %v280, %v278
    %v331 = vpack.c.b16 %v283, %v281
    %v332 = vpack.c.b16 %v284, %v282
    %381 = vmatprep.subr.bf16.mxu0 %v286
    %382 = vmatpush1.bf16.msra.mxu0 %v285
    %383 = vmatprep.subr.bf16.mxu0 %v288
    %384 = vmatpush1.bf16.msra.mxu0 %v287
    %385 = vmatprep.subr.bf16.mxu0 %v290
    %386 = vmatpush1.bf16.msra.mxu0 %v289
    %387 = vmatprep.subr.bf16.mxu0 %v292
    %388 = vmatpush1.bf16.msra.mxu0 %v291
    %389 = vmatprep.subr.bf16.mxu0 %v294
    %390 = vmatpush1.bf16.msra.mxu0 %v293
    %391 = vmatprep.subr.bf16.mxu0 %v296
    %392 = vmatpush1.bf16.msra.mxu0 %v295
    %393 = vmatprep.subr.bf16.mxu0 %v298
    %394 = vmatpush1.bf16.msra.mxu0 %v297
    %395 = vmatprep.subr.bf16.mxu0 %v300
    %396 = vmatpush1.bf16.msra.mxu0 %v299
    %397 = vmatprep.subr.bf16.mxu0 %v302
    %398 = vmatpush1.bf16.msra.mxu0 %v301
    %399 = vmatprep.subr.bf16.mxu0 %v304
    %400 = vmatpush1.bf16.msra.mxu0 %v303
    %401 = vmatprep.subr.bf16.mxu0 %v306
    %402 = vmatpush1.bf16.msra.mxu0 %v305
    %403 = vmatprep.subr.bf16.mxu0 %v308
    %404 = vmatpush1.bf16.msra.mxu0 %v307
    %405 = vmatprep.subr.bf16.mxu0 %v310
    %406 = vmatpush1.bf16.msra.mxu0 %v309
    %407 = vmatprep.subr.bf16.mxu0 %v312
    %408 = vmatpush1.bf16.msra.mxu0 %v311
    %409 = vmatprep.subr.bf16.mxu0 %v314
    %410 = vmatpush1.bf16.msra.mxu0 %v313
    %411 = vmatprep.subr.bf16.mxu0 %v316
    %412 = vmatpush1.bf16.msra.mxu0 %v315
    %413 = vmatprep.mubr.bf16.mxu0 %v91
    %414 = vmatmul.mubr.bf16.gmra.mrb[0].mxu0 %v90
    %v415 = vpop.f32.mrb[0].mxu0
    %v416 = vadd.f32 0.0, %v415
    %v417 = vpop.f32.mrb[0].mxu0
    %v418 = vadd.f32 0.0, %v417
    %v419 = vpop.f32.mrb[0].mxu0
    %v420 = vpop.f32.mrb[0].mxu0
    %421 = vdwg.mxu0
    %422 = vmatprep.subr.bf16.mxu0 %v318
    %423 = vmatpush1.bf16.msra.mxu0 %v317
    %424 = vmatprep.subr.bf16.mxu0 %v320
    %425 = vmatpush1.bf16.msra.mxu0 %v319
    %426 = vmatprep.subr.bf16.mxu0 %v322
    %427 = vmatpush1.bf16.msra.mxu0 %v321
    %428 = vmatprep.subr.bf16.mxu0 %v324
    %429 = vmatpush1.bf16.msra.mxu0 %v323
    %430 = vmatprep.subr.bf16.mxu0 %v326
    %431 = vmatpush1.bf16.msra.mxu0 %v325
    %432 = vmatprep.subr.bf16.mxu0 %v328
    %433 = vmatpush1.bf16.msra.mxu0 %v327
    %434 = vmatprep.subr.bf16.mxu0 %v330
    %435 = vmatpush1.bf16.msra.mxu0 %v329
    %436 = vmatprep.subr.bf16.mxu0 %v332
    %437 = vmatpush1.bf16.msra.mxu0 %v331
    %438 = vmatprep.subr.bf16.mxu0 0
    %439 = vmatpush1.bf16.msra.mxu0 0
    %440 = vmatprep.subr.bf16.mxu0 0
    %441 = vmatpush1.bf16.msra.mxu0 0
    %442 = vmatprep.subr.bf16.mxu0 0
    %443 = vmatpush1.bf16.msra.mxu0 0
    %444 = vmatprep.subr.bf16.mxu0 0
    %445 = vmatpush1.bf16.msra.mxu0 0
    %446 = vmatprep.subr.bf16.mxu0 0
    %447 = vmatpush1.bf16.msra.mxu0 0
    %448 = vmatprep.subr.bf16.mxu0 0
    %449 = vmatpush1.bf16.msra.mxu0 0
    %450 = vmatprep.subr.bf16.mxu0 0
    %451 = vmatpush1.bf16.msra.mxu0 0
    %452 = vmatprep.subr.bf16.mxu0 0
    %453 = vmatpush1.bf16.msra.mxu0 0
    %454 = vmatprep.mubr.bf16.mxu0 0
    %455 = vmatmul.mubr.bf16.gmra.mrb[0].mxu0 %v92
    %v456 = vpop.f32.mrb[0].mxu0
    %v457 = vadd.f32 %v416, %v456
    %v458 = vpop.f32.mrb[0].mxu0
    %v459 = vadd.f32 %v418, %v458
    %v460 = vpop.f32.mrb[0].mxu0
    %v461 = vpop.f32.mrb[0].mxu0
    %462 = vdwg.mxu0
    %v463 = vld [vmem:[%s2] sm:$0x3]
    %v464 = vld [vmem:[%s3] sm:$0x3]
    %v465 = vrot.slane %v457, 4
    %v466 = vadd.f32 %v457, %v465
    %v467 = vrot.slane %v466, 2
    %v468 = vadd.f32 %v466, %v467
    %v469 = vrot.slane %v468, 1
    %v470 = vadd.f32 %v468, %v469
    %v471 = vrot.slane %v459, 4
    %v472 = vadd.f32 %v459, %v471
    %v473 = vrot.slane %v472, 2
    %v474 = vadd.f32 %v472, %v473
    %v475 = vrot.slane %v474, 1
    %v476 = vadd.f32 %v474, %v475
    %v477 = vrcp.pop 8.0
    %v478 = vmul.f32 %v470, %v477
    %v479 = vmul.f32 %v476, %v477
    %v480 = vmul.f32 %v457, %v457
    %v481 = vmul.f32 %v459, %v459
    %v482 = vrot.slane %v480, 4
    %v483 = vadd.f32 %v480, %v482
    %v484 = vrot.slane %v483, 2
    %v485 = vadd.f32 %v483, %v484
    %v486 = vrot.slane %v485, 1
    %v487 = vadd.f32 %v485, %v486
    %v488 = vrot.slane %v481, 4
    %v489 = vadd.f32 %v481, %v488
    %v490 = vrot.slane %v489, 2
    %v491 = vadd.f32 %v489, %v490
    %v492 = vrot.slane %v491, 1
    %v493 = vadd.f32 %v491, %v492
    %v494 = vmul.f32 %v487, %v477
    %v495 = vmul.f32 %v493, %v477
    %v496 = vmul.f32 %v478, %v478
    %v497 = vmul.f32 %v479, %v479
    %v498 = vsub.f32 %v494, %v496
    %v499 = vsub.f32 %v495, %v497
    %v500 = vadd.f32 %v498, 1e-05
    %v501 = vadd.f32 %v499, 1e-05
    %v502 = vrsqrt.pop %v500
    %v503 = vrsqrt.pop %v501
    %v506 = vcombine.low %v502, %v503
    %v508 = vunpack.c.l.s4 1966171168
    %v509 = vunpack.c.0.s8 %v508
    %v510 = vlaneseq
    %v511 = vshrl.u32 %v510, 7
    %v512 = vsub.s32 %v509, %v511
    %v513 = vrot.slane %v506, %v512
    %v515 = vunpack.c.l.s4 1966171168
    %v516 = vunpack.c.0.s8 %v515
    %v517 = vlaneseq
    %v518 = vshrl.u32 %v517, 7
    %v519 = vsub.s32 %v516, %v518
    %v520 = vrot.slane %v513, %v519
    %v522 = vmul.f32 %v463, %v520
    %v524 = vlaneseq
    %v525 = vshrl.u32 %v524, 7
    %v526 = vsub.s32 0, %v525
    %v527 = vrot.slane %v522, %v526
    %v528 = vlaneseq
    %v529 = vshrl.u32 %v528, 7
    %v530 = vsub.s32 1, %v529
    %v531 = vrot.slane %v522, %v530
    %v534 = vmul.f32 %v478, %v527
    %v535 = vmul.f32 %v479, %v531
    %v538 = vcombine.low %v534, %v535
    %v540 = vunpack.c.l.s4 1966171168
    %v541 = vunpack.c.0.s8 %v540
    %v542 = vlaneseq
    %v543 = vshrl.u32 %v542, 7
    %v544 = vsub.s32 %v541, %v543
    %v545 = vrot.slane %v538, %v544
    %v547 = vunpack.c.l.s4 1966171168
    %v548 = vunpack.c.0.s8 %v547
    %v549 = vlaneseq
    %v550 = vshrl.u32 %v549, 7
    %v551 = vsub.s32 %v548, %v550
    %v552 = vrot.slane %v545, %v551
    %v554 = vsub.f32 %v464, %v552
    %v555 = vmul.f32 %v457, %v527
    %v556 = vmul.f32 %v459, %v531
    %v558 = vlaneseq
    %v559 = vshrl.u32 %v558, 7
    %v560 = vsub.s32 0, %v559
    %v561 = vrot.slane %v554, %v560
    %v562 = vlaneseq
    %v563 = vshrl.u32 %v562, 7
    %v564 = vsub.s32 1, %v563
    %v565 = vrot.slane %v554, %v564
    %v568 = vadd.f32 %v555, %v561
    %v569 = vadd.f32 %v556, %v565
    %vm570 = vcmp.ge.f32.partialorder %v568, 0.0
    %vm571 = vcmp.ge.f32.partialorder %v569, 0.0
    %v572 = vmul.f32 %v568, 0.2
    %v573 = vmul.f32 %v569, 0.2
    %v574 = vsel %vm570, %v568, %v572
    %v575 = vsel %vm571, %v569, %v573
    %v576 = vpack.c.bf16 %v574, %v574
    %v577 = vpack.c.bf16 %v575, %v575
    %v578 = vld [vmem:[#allocation7] sm:$0xff]
    %v579 = vld [vmem:[#allocation7 + $0x8] sm:$0xff]
    %v580 = vld [vmem:[#allocation7 + $0x10] sm:$0xff]
    %v581 = vld [vmem:[#allocation7 + $0x18] sm:$0xff]
    %v582 = vld [vmem:[#allocation7 + $0x20] sm:$0xff]
    %v583 = vld [vmem:[#allocation7 + $0x28] sm:$0xff]
    %v584 = vld [vmem:[#allocation7 + $0x30] sm:$0xff]
    %v585 = vld [vmem:[#allocation7 + $0x38] sm:$0xff]
    %v586 = vld [vmem:[#allocation7 + $0x40] sm:$0xff]
    %v587 = vld [vmem:[#allocation7 + $0x48] sm:$0xff]
    %v588 = vld [vmem:[#allocation7 + $0x50] sm:$0xff]
    %v589 = vld [vmem:[#allocation7 + $0x58] sm:$0xff]
    %v590 = vld [vmem:[#allocation7 + $0x60] sm:$0xff]
    %v591 = vld [vmem:[#allocation7 + $0x68] sm:$0xff]
    %v592 = vld [vmem:[#allocation7 + $0x70] sm:$0xff]
    %v593 = vld [vmem:[#allocation7 + $0x78] sm:$0xff]
    %v594 = vld [vmem:[#allocation7 + $0x80] sm:$0xff]
    %v595 = vld [vmem:[#allocation7 + $0x88] sm:$0xff]
    %v596 = vld [vmem:[#allocation7 + $0x90] sm:$0xff]
    %v597 = vld [vmem:[#allocation7 + $0x98] sm:$0xff]
    %v598 = vld [vmem:[#allocation7 + $0xa0] sm:$0xff]
    %v599 = vld [vmem:[#allocation7 + $0xa8] sm:$0xff]
    %v600 = vld [vmem:[#allocation7 + $0xb0] sm:$0xff]
    %v601 = vld [vmem:[#allocation7 + $0xb8] sm:$0xff]
    %v602 = vld [vmem:[#allocation7 + $0xc0] sm:$0xff]
    %v603 = vld [vmem:[#allocation7 + $0xc8] sm:$0xff]
    %v604 = vld [vmem:[#allocation7 + $0xd0] sm:$0xff]
    %v605 = vld [vmem:[#allocation7 + $0xd8] sm:$0xff]
    %v606 = vld [vmem:[#allocation7 + $0xe0] sm:$0xff]
    %v607 = vld [vmem:[#allocation7 + $0xe8] sm:$0xff]
    %v608 = vld [vmem:[#allocation7 + $0xf0] sm:$0xff]
    %v609 = vld [vmem:[#allocation7 + $0xf8] sm:$0xff]
    %v642 = vunpack.c.l.b16 %v578
    %v643 = vunpack.c.h.b16 %v578
    %v644 = vunpack.c.l.b16 %v579
    %v645 = vunpack.c.h.b16 %v579
    %v646 = vunpack.c.l.b16 %v580
    %v647 = vunpack.c.h.b16 %v580
    %v648 = vunpack.c.l.b16 %v581
    %v649 = vunpack.c.h.b16 %v581
    %v650 = vunpack.c.l.b16 %v582
    %v651 = vunpack.c.h.b16 %v582
    %v652 = vunpack.c.l.b16 %v583
    %v653 = vunpack.c.h.b16 %v583
    %v654 = vunpack.c.l.b16 %v584
    %v655 = vunpack.c.h.b16 %v584
    %v656 = vunpack.c.l.b16 %v585
    %v657 = vunpack.c.h.b16 %v585
    %v658 = vunpack.c.l.b16 %v586
    %v659 = vunpack.c.h.b16 %v586
    %v660 = vunpack.c.l.b16 %v587
    %v661 = vunpack.c.h.b16 %v587
    %v662 = vunpack.c.l.b16 %v588
    %v663 = vunpack.c.h.b16 %v588
    %v664 = vunpack.c.l.b16 %v589
    %v665 = vunpack.c.h.b16 %v589
    %v666 = vunpack.c.l.b16 %v590
    %v667 = vunpack.c.h.b16 %v590
    %v668 = vunpack.c.l.b16 %v591
    %v669 = vunpack.c.h.b16 %v591
    %v670 = vunpack.c.l.b16 %v592
    %v671 = vunpack.c.h.b16 %v592
    %v672 = vunpack.c.l.b16 %v593
    %v673 = vunpack.c.h.b16 %v593
    %v674 = vunpack.c.l.b16 %v594
    %v675 = vunpack.c.h.b16 %v594
    %v676 = vunpack.c.l.b16 %v595
    %v677 = vunpack.c.h.b16 %v595
    %v678 = vunpack.c.l.b16 %v596
    %v679 = vunpack.c.h.b16 %v596
    %v680 = vunpack.c.l.b16 %v597
    %v681 = vunpack.c.h.b16 %v597
    %v682 = vunpack.c.l.b16 %v598
    %v683 = vunpack.c.h.b16 %v598
    %v684 = vunpack.c.l.b16 %v599
    %v685 = vunpack.c.h.b16 %v599
    %v686 = vunpack.c.l.b16 %v600
    %v687 = vunpack.c.h.b16 %v600
    %v688 = vunpack.c.l.b16 %v601
    %v689 = vunpack.c.h.b16 %v601
    %v690 = vunpack.c.l.b16 %v602
    %v691 = vunpack.c.h.b16 %v602
    %v692 = vunpack.c.l.b16 %v603
    %v693 = vunpack.c.h.b16 %v603
    %v694 = vunpack.c.l.b16 %v604
    %v695 = vunpack.c.h.b16 %v604
    %v696 = vunpack.c.l.b16 %v605
    %v697 = vunpack.c.h.b16 %v605
    %v698 = vunpack.c.l.b16 %v606
    %v699 = vunpack.c.h.b16 %v606
    %v700 = vunpack.c.l.b16 %v607
    %v701 = vunpack.c.h.b16 %v607
    %v702 = vunpack.c.l.b16 %v608
    %v703 = vunpack.c.h.b16 %v608
    %v704 = vunpack.c.l.b16 %v609
    %v705 = vunpack.c.h.b16 %v609
    %v706 = vpack.c.b16 %v644, %v642
    %v707 = vpack.c.b16 %v645, %v643
    %v708 = vpack.c.b16 %v648, %v646
    %v709 = vpack.c.b16 %v649, %v647
    %v710 = vpack.c.b16 %v652, %v650
    %v711 = vpack.c.b16 %v653, %v651
    %v712 = vpack.c.b16 %v656, %v654
    %v713 = vpack.c.b16 %v657, %v655
    %v714 = vpack.c.b16 %v660, %v658
    %v715 = vpack.c.b16 %v661, %v659
    %v716 = vpack.c.b16 %v664, %v662
    %v717 = vpack.c.b16 %v665, %v663
    %v718 = vpack.c.b16 %v668, %v666
    %v719 = vpack.c.b16 %v669, %v667
    %v720 = vpack.c.b16 %v672, %v670
    %v721 = vpack.c.b16 %v673, %v671
    %v722 = vpack.c.b16 %v676, %v674
    %v723 = vpack.c.b16 %v677, %v675
    %v724 = vpack.c.b16 %v680, %v678
    %v725 = vpack.c.b16 %v681, %v679
    %v726 = vpack.c.b16 %v684, %v682
    %v727 = vpack.c.b16 %v685, %v683
    %v728 = vpack.c.b16 %v688, %v686
    %v729 = vpack.c.b16 %v689, %v687
    %v730 = vpack.c.b16 %v692, %v690
    %v731 = vpack.c.b16 %v693, %v691
    %v732 = vpack.c.b16 %v696, %v694
    %v733 = vpack.c.b16 %v697, %v695
    %v734 = vpack.c.b16 %v700, %v698
    %v735 = vpack.c.b16 %v701, %v699
    %v736 = vpack.c.b16 %v704, %v702
    %v737 = vpack.c.b16 %v705, %v703
    %770 = vmatprep.subr.bf16.mxu0 %v707
    %771 = vmatpush1.bf16.msra.mxu0 %v706
    %772 = vmatprep.subr.bf16.mxu0 %v709
    %773 = vmatpush1.bf16.msra.mxu0 %v708
    %774 = vmatprep.subr.bf16.mxu0 %v711
    %775 = vmatpush1.bf16.msra.mxu0 %v710
    %776 = vmatprep.subr.bf16.mxu0 %v713
    %777 = vmatpush1.bf16.msra.mxu0 %v712
    %778 = vmatprep.subr.bf16.mxu0 %v715
    %779 = vmatpush1.bf16.msra.mxu0 %v714
    %780 = vmatprep.subr.bf16.mxu0 %v717
    %781 = vmatpush1.bf16.msra.mxu0 %v716
    %782 = vmatprep.subr.bf16.mxu0 %v719
    %783 = vmatpush1.bf16.msra.mxu0 %v718
    %784 = vmatprep.subr.bf16.mxu0 %v721
    %785 = vmatpush1.bf16.msra.mxu0 %v720
    %786 = vmatprep.subr.bf16.mxu0 %v723
    %787 = vmatpush1.bf16.msra.mxu0 %v722
    %788 = vmatprep.subr.bf16.mxu0 %v725
    %789 = vmatpush1.bf16.msra.mxu0 %v724
    %790 = vmatprep.subr.bf16.mxu0 %v727
    %791 = vmatpush1.bf16.msra.mxu0 %v726
    %792 = vmatprep.subr.bf16.mxu0 %v729
    %793 = vmatpush1.bf16.msra.mxu0 %v728
    %794 = vmatprep.subr.bf16.mxu0 %v731
    %795 = vmatpush1.bf16.msra.mxu0 %v730
    %796 = vmatprep.subr.bf16.mxu0 %v733
    %797 = vmatpush1.bf16.msra.mxu0 %v732
    %798 = vmatprep.subr.bf16.mxu0 %v735
    %799 = vmatpush1.bf16.msra.mxu0 %v734
    %800 = vmatprep.subr.bf16.mxu0 %v737
    %801 = vmatpush1.bf16.msra.mxu0 %v736
    %802 = vmatprep.mubr.bf16.mxu0 %v577
    %803 = vmatmul.mubr.bf16.gmra.mrb[0].mxu0 %v576
    %v804 = vpop.f32.mrb[0].mxu0
    %v805 = vadd.f32 0.0, %v804
    %v806 = vpop.f32.mrb[0].mxu0
    %v807 = vadd.f32 0.0, %v806
    %v808 = vpop.f32.mrb[0].mxu0
    %v809 = vpop.f32.mrb[0].mxu0
    %810 = vdwg.mxu0
    %v811 = vld [vmem:[%s5] sm:$0x3]
    %v812 = vld [vmem:[%s6] sm:$0x3]
    %v813 = vrot.slane %v805, 4
    %v814 = vadd.f32 %v805, %v813
    %v815 = vrot.slane %v814, 2
    %v816 = vadd.f32 %v814, %v815
    %v817 = vrot.slane %v816, 1
    %v818 = vadd.f32 %v816, %v817
    %v819 = vrot.slane %v807, 4
    %v820 = vadd.f32 %v807, %v819
    %v821 = vrot.slane %v820, 2
    %v822 = vadd.f32 %v820, %v821
    %v823 = vrot.slane %v822, 1
    %v824 = vadd.f32 %v822, %v823
    %v825 = vmul.f32 %v818, %v477
    %v826 = vmul.f32 %v824, %v477
    %v827 = vmul.f32 %v805, %v805
    %v828 = vmul.f32 %v807, %v807
    %v829 = vrot.slane %v827, 4
    %v830 = vadd.f32 %v827, %v829
    %v831 = vrot.slane %v830, 2
    %v832 = vadd.f32 %v830, %v831
    %v833 = vrot.slane %v832, 1
    %v834 = vadd.f32 %v832, %v833
    %v835 = vrot.slane %v828, 4
    %v836 = vadd.f32 %v828, %v835
    %v837 = vrot.slane %v836, 2
    %v838 = vadd.f32 %v836, %v837
    %v839 = vrot.slane %v838, 1
    %v840 = vadd.f32 %v838, %v839
    %v841 = vmul.f32 %v834, %v477
    %v842 = vmul.f32 %v840, %v477
    %v843 = vmul.f32 %v825, %v825
    %v844 = vmul.f32 %v826, %v826
    %v845 = vsub.f32 %v841, %v843
    %v846 = vsub.f32 %v842, %v844
    %v847 = vadd.f32 %v845, 1e-05
    %v848 = vadd.f32 %v846, 1e-05
    %v849 = vrsqrt.pop %v847
    %v850 = vrsqrt.pop %v848
    %v853 = vcombine.low %v849, %v850
    %v855 = vunpack.c.l.s4 1966171168
    %v856 = vunpack.c.0.s8 %v855
    %v857 = vlaneseq
    %v858 = vshrl.u32 %v857, 7
    %v859 = vsub.s32 %v856, %v858
    %v860 = vrot.slane %v853, %v859
    %v862 = vunpack.c.l.s4 1966171168
    %v863 = vunpack.c.0.s8 %v862
    %v864 = vlaneseq
    %v865 = vshrl.u32 %v864, 7
    %v866 = vsub.s32 %v863, %v865
    %v867 = vrot.slane %v860, %v866
    %v869 = vmul.f32 %v811, %v867
    %v871 = vlaneseq
    %v872 = vshrl.u32 %v871, 7
    %v873 = vsub.s32 0, %v872
    %v874 = vrot.slane %v869, %v873
    %v875 = vlaneseq
    %v876 = vshrl.u32 %v875, 7
    %v877 = vsub.s32 1, %v876
    %v878 = vrot.slane %v869, %v877
    %v881 = vmul.f32 %v825, %v874
    %v882 = vmul.f32 %v826, %v878
    %v885 = vcombine.low %v881, %v882
    %v887 = vunpack.c.l.s4 1966171168
    %v888 = vunpack.c.0.s8 %v887
    %v889 = vlaneseq
    %v890 = vshrl.u32 %v889, 7
    %v891 = vsub.s32 %v888, %v890
    %v892 = vrot.slane %v885, %v891
    %v894 = vunpack.c.l.s4 1966171168
    %v895 = vunpack.c.0.s8 %v894
    %v896 = vlaneseq
    %v897 = vshrl.u32 %v896, 7
    %v898 = vsub.s32 %v895, %v897
    %v899 = vrot.slane %v892, %v898
    %v901 = vsub.f32 %v812, %v899
    %v902 = vmul.f32 %v805, %v874
    %v903 = vmul.f32 %v807, %v878
    %v905 = vlaneseq
    %v906 = vshrl.u32 %v905, 7
    %v907 = vsub.s32 0, %v906
    %v908 = vrot.slane %v901, %v907
    %v909 = vlaneseq
    %v910 = vshrl.u32 %v909, 7
    %v911 = vsub.s32 1, %v910
    %v912 = vrot.slane %v901, %v911
    %v915 = vadd.f32 %v902, %v908
    %v916 = vadd.f32 %v903, %v912
    %vm917 = vcmp.ge.f32.partialorder %v915, 0.0
    %vm918 = vcmp.ge.f32.partialorder %v916, 0.0
    %v919 = vmul.f32 %v915, 0.2
    %v920 = vmul.f32 %v916, 0.2
    %v921 = vsel %vm917, %v915, %v919
    %v922 = vsel %vm918, %v916, %v920
    %v923 = vpack.c.bf16 %v921, %v921
    %v924 = vpack.c.bf16 %v922, %v922
    %v925 = vld [vmem:[#allocation8] sm:$0xf]
    %v926 = vld [vmem:[#allocation8 + $0x4] sm:$0xf]
    %v927 = vld [vmem:[#allocation8 + $0x8] sm:$0xf]
    %v928 = vld [vmem:[#allocation8 + $0xc] sm:$0xf]
    %v929 = vld [vmem:[#allocation8 + $0x10] sm:$0xf]
    %v930 = vld [vmem:[#allocation8 + $0x14] sm:$0xf]
    %v931 = vld [vmem:[#allocation8 + $0x18] sm:$0xf]
    %v932 = vld [vmem:[#allocation8 + $0x1c] sm:$0xf]
    %v933 = vld [vmem:[#allocation8 + $0x20] sm:$0xf]
    %v934 = vld [vmem:[#allocation8 + $0x24] sm:$0xf]
    %v935 = vld [vmem:[#allocation8 + $0x28] sm:$0xf]
    %v936 = vld [vmem:[#allocation8 + $0x2c] sm:$0xf]
    %v937 = vld [vmem:[#allocation8 + $0x30] sm:$0xf]
    %v938 = vld [vmem:[#allocation8 + $0x34] sm:$0xf]
    %v939 = vld [vmem:[#allocation8 + $0x38] sm:$0xf]
    %v940 = vld [vmem:[#allocation8 + $0x3c] sm:$0xf]
    %v941 = vld [vmem:[#allocation8 + $0x40] sm:$0xf]
    %v942 = vld [vmem:[#allocation8 + $0x44] sm:$0xf]
    %v943 = vld [vmem:[#allocation8 + $0x48] sm:$0xf]
    %v944 = vld [vmem:[#allocation8 + $0x4c] sm:$0xf]
    %v945 = vld [vmem:[#allocation8 + $0x50] sm:$0xf]
    %v946 = vld [vmem:[#allocation8 + $0x54] sm:$0xf]
    %v947 = vld [vmem:[#allocation8 + $0x58] sm:$0xf]
    %v948 = vld [vmem:[#allocation8 + $0x5c] sm:$0xf]
    %v949 = vld [vmem:[#allocation8 + $0x60] sm:$0xf]
    %v950 = vld [vmem:[#allocation8 + $0x64] sm:$0xf]
    %v951 = vld [vmem:[#allocation8 + $0x68] sm:$0xf]
    %v952 = vld [vmem:[#allocation8 + $0x6c] sm:$0xf]
    %v953 = vld [vmem:[#allocation8 + $0x70] sm:$0xf]
    %v954 = vld [vmem:[#allocation8 + $0x74] sm:$0xf]
    %v955 = vld [vmem:[#allocation8 + $0x78] sm:$0xf]
    %v956 = vld [vmem:[#allocation8 + $0x7c] sm:$0xf]
    %v957 = vld [vmem:[%s8] sm:$0x1]
    %v959 = vlaneseq
    %v960 = vshrl.u32 %v959, 7
    %v961 = vsub.s32 0, %v960
    %v962 = vrot.slane %v957, %v961
    %v996 = vunpack.c.l.b16 %v925
    %v997 = vunpack.c.l.b16 %v926
    %v998 = vunpack.c.l.b16 %v927
    %v999 = vunpack.c.l.b16 %v928
    %v1000 = vunpack.c.l.b16 %v929
    %v1001 = vunpack.c.l.b16 %v930
    %v1002 = vunpack.c.l.b16 %v931
    %v1003 = vunpack.c.l.b16 %v932
    %v1004 = vunpack.c.l.b16 %v933
    %v1005 = vunpack.c.l.b16 %v934
    %v1006 = vunpack.c.l.b16 %v935
    %v1007 = vunpack.c.l.b16 %v936
    %v1008 = vunpack.c.l.b16 %v937
    %v1009 = vunpack.c.l.b16 %v938
    %v1010 = vunpack.c.l.b16 %v939
    %v1011 = vunpack.c.l.b16 %v940
    %v1012 = vunpack.c.l.b16 %v941
    %v1013 = vunpack.c.l.b16 %v942
    %v1014 = vunpack.c.l.b16 %v943
    %v1015 = vunpack.c.l.b16 %v944
    %v1016 = vunpack.c.l.b16 %v945
    %v1017 = vunpack.c.l.b16 %v946
    %v1018 = vunpack.c.l.b16 %v947
    %v1019 = vunpack.c.l.b16 %v948
    %v1020 = vunpack.c.l.b16 %v949
    %v1021 = vunpack.c.l.b16 %v950
    %v1022 = vunpack.c.l.b16 %v951
    %v1023 = vunpack.c.l.b16 %v952
    %v1024 = vunpack.c.l.b16 %v953
    %v1025 = vunpack.c.l.b16 %v954
    %v1026 = vunpack.c.l.b16 %v955
    %v1027 = vunpack.c.l.b16 %v956
    %v1028 = vpack.c.b16 %v997, %v996
    %v1029 = vpack.c.b16 %v999, %v998
    %v1030 = vpack.c.b16 %v1001, %v1000
    %v1031 = vpack.c.b16 %v1003, %v1002
    %v1032 = vpack.c.b16 %v1005, %v1004
    %v1033 = vpack.c.b16 %v1007, %v1006
    %v1034 = vpack.c.b16 %v1009, %v1008
    %v1035 = vpack.c.b16 %v1011, %v1010
    %v1036 = vpack.c.b16 %v1013, %v1012
    %v1037 = vpack.c.b16 %v1015, %v1014
    %v1038 = vpack.c.b16 %v1017, %v1016
    %v1039 = vpack.c.b16 %v1019, %v1018
    %v1040 = vpack.c.b16 %v1021, %v1020
    %v1041 = vpack.c.b16 %v1023, %v1022
    %v1042 = vpack.c.b16 %v1025, %v1024
    %v1043 = vpack.c.b16 %v1027, %v1026
    %1060 = vmatprep.subr.bf16.mxu0 0
    %1061 = vmatpush1.bf16.msra.mxu0 %v1028
    %1062 = vmatprep.subr.bf16.mxu0 0
    %1063 = vmatpush1.bf16.msra.mxu0 %v1029
    %1064 = vmatprep.subr.bf16.mxu0 0
    %1065 = vmatpush1.bf16.msra.mxu0 %v1030
    %1066 = vmatprep.subr.bf16.mxu0 0
    %1067 = vmatpush1.bf16.msra.mxu0 %v1031
    %1068 = vmatprep.subr.bf16.mxu0 0
    %1069 = vmatpush1.bf16.msra.mxu0 %v1032
    %1070 = vmatprep.subr.bf16.mxu0 0
    %1071 = vmatpush1.bf16.msra.mxu0 %v1033
    %1072 = vmatprep.subr.bf16.mxu0 0
    %1073 = vmatpush1.bf16.msra.mxu0 %v1034
    %1074 = vmatprep.subr.bf16.mxu0 0
    %1075 = vmatpush1.bf16.msra.mxu0 %v1035
    %1076 = vmatprep.subr.bf16.mxu0 0
    %1077 = vmatpush1.bf16.msra.mxu0 %v1036
    %1078 = vmatprep.subr.bf16.mxu0 0
    %1079 = vmatpush1.bf16.msra.mxu0 %v1037
    %1080 = vmatprep.subr.bf16.mxu0 0
    %1081 = vmatpush1.bf16.msra.mxu0 %v1038
    %1082 = vmatprep.subr.bf16.mxu0 0
    %1083 = vmatpush1.bf16.msra.mxu0 %v1039
    %1084 = vmatprep.subr.bf16.mxu0 0
    %1085 = vmatpush1.bf16.msra.mxu0 %v1040
    %1086 = vmatprep.subr.bf16.mxu0 0
    %1087 = vmatpush1.bf16.msra.mxu0 %v1041
    %1088 = vmatprep.subr.bf16.mxu0 0
    %1089 = vmatpush1.bf16.msra.mxu0 %v1042
    %1090 = vmatprep.subr.bf16.mxu0 0
    %1091 = vmatpush1.bf16.msra.mxu0 %v1043
    %1092 = vmatprep.mubr.bf16.mxu0 %v924
    %1093 = vmatmul.mubr.bf16.gmra.mrb[0].mxu0 %v923
    %v1094 = vpop.f32.mrb[0].mxu0
    %v1095 = vadd.f32 %v962, %v1094
    %v1096 = vpop.f32.mrb[0].mxu0
    %v1097 = vpop.f32.mrb[0].mxu0
    %v1098 = vpop.f32.mrb[0].mxu0
    %1099 = vdwg.mxu0
    %1100 = vst [vmem:[#allocation10] sm:$0xff] %v1095
    // Predicated region
    $region54: #{tpu_custom_call.1} parent=1 // pred_check
      _
    $region55: #{tpu_custom_call.1} parent=1 // pred_check_branch
      %1102 = sbr.rel (0) target = $region57
    $region56: #{tpu_custom_call.1} parent=1 // pred_region
      %s1104 = ssub.s32 128, 128
      %1105 = vsyncadd [#allocation4], %s1104
      %s1107 = sshll.u32 [#allocation10], 4
      %s1108 = int_to_ptr.vmem [resolvable:$true] %s1107
      %1110 = dma.vmem_to_hbm [thread:$0]  %s1108, 128, %s9, [#allocation4]
    $region57: #{tpu_custom_call.1} parent=1 // pred_fallthru
      _
    // Predicated region
    $region58: #{tpu_custom_call.1} parent=1 // pred_check
      _
    $region59: #{tpu_custom_call.1} parent=1 // pred_check_branch
      %1112 = sbr.rel (0) target = $region61
    $region60: #{tpu_custom_call.1} parent=1 // pred_region
      %1113 = dma.done [#allocation4], 128
    $region61: #{tpu_custom_call.1} parent=1 // pred_fallthru
      _
    %1114 = vsyncpa [#allocation3], 1
    %1115 = vsyncpa [#allocation6], 1
    %1116 = vsyncpa [#allocation9], 1
    %1117 = vsyncpa [#allocation4], 1

</llo_original>
